<compile_context>
chip_gen: v5e
topology: v5e:2x2
jax: 0.10.0
libtpu: 0.0.40
codegen_flags: <defaults>
</compile_context>

<pallas_src>
import jax
import jax.numpy as jnp
from jax.experimental import pallas as pl
from jax.experimental.pallas import tpu as pltpu

# Permutation instantiated by this script: NCHW -> NHWC.
DIMS = (0, 2, 3, 1)


def _transpose_minor_kernel(x_ref, o_ref):
    """Per-tile body: (C, T) -> (T, C) minor-dim swap (single XLU transpose)."""
    o_ref[...] = jnp.transpose(x_ref[...], (1, 0))


def _vmem_budget_bytes():
    """Returns (scoped VMEM limit to request, byte budget for live tile buffers)."""
    try:
        vmem_cap = pltpu.get_tpu_info().vmem_capacity_bytes
    except Exception:
        vmem_cap = 64 * 1024 * 1024  # conservative default: v7x has 64 MiB per TC
    # Request at most ~3/4 of physical VMEM, capped at 96 MiB (v5e/v6e).
    vmem_limit = min((vmem_cap * 3) // 4, 96 * 1024 * 1024)
    # in-tile + out-tile, each double-buffered by the pipeline -> keep their
    # total at roughly half of the requested limit for headroom.
    return vmem_limit, vmem_limit // 2


def _pick_spatial_tile(n, c, itemsize, budget_bytes):
    """Largest tile T (multiple of 128 dividing n, or n itself) fitting budget.

    A multiple of 128 satisfies both the lane rule on the input block's last
    dim and every dtype's sublane-packing rule on the output block's
    second-to-last dim (8/16/32 all divide 128).
    """
    # 4 live buffers: (C, T) input + (T, C) output, double-buffered.
    t_max = max(128, budget_bytes // (4 * c * itemsize))
    if n <= t_max:
        return n
    t = (t_max // 128) * 128
    while t >= 128:
        if n % t == 0:
            return t
        t -= 128
    return n  # no aligned divisor: one full-extent tile (always layout-legal)


def permution(x: jax.Array, dims=DIMS, contiguous: bool = False) -> jax.Array:
    """Pallas equivalent of Permution(*dims)(x)."""
    del contiguous  # materialization is implicit in JAX -> no-op
    dims = tuple(dims)

    if x.ndim != 4 or dims != DIMS:
        # General Permution(*dims): plain XLA transpose keeps full generality.
        # (Also the right choice for tiny tensors / fuse-into-consumer cases.)
        return jnp.transpose(x, dims)

    B, C, H, W = x.shape
    N = H * W
    itemsize = jnp.dtype(x.dtype).itemsize

    # Free view: (B, C, H, W) -> (B, C, H*W); C-major, spatial-minor.
    x3 = x.reshape(B, C, N)

    vmem_limit, tile_budget = _vmem_budget_bytes()
    T = _pick_spatial_tile(N, C, itemsize, tile_budget)
    n_tiles = pl.cdiv(N, T)

    y3 = pl.pallas_call(
        _transpose_minor_kernel,
        out_shape=jax.ShapeDtypeStruct((B, N, C), x.dtype),
        grid=(B, n_tiles),
        # Batch dim squeezed: kernel sees 2-D (C, T) / (T, C) tiles.
        # Input block last dims (C, T): C is the full dim, T is a 128-multiple
        # (or full) -> (8, 128) rule satisfied for every dtype.
        in_specs=[
            pl.BlockSpec((pl.Squeezed(), C, T), lambda b, t: (b, 0, t)),
        ],
        out_specs=pl.BlockSpec((pl.Squeezed(), T, C), lambda b, t: (b, t, 0)),
        # NOTE: if DMA is still exposed after tiling, pipeline_mode=pl.Buffered(3)
        # on the input spec is the next lever (re-check VMEM budget on v7x).
        compiler_params=pltpu.CompilerParams(
            dimension_semantics=("parallel", "parallel"),
            vmem_limit_bytes=vmem_limit,
        ),
        cost_estimate=pl.CostEstimate(
            flops=0,
            transcendentals=0,
            bytes_accessed=2 * x.size * itemsize,
        ),
    )(x3)

    # Free view back to NHWC: (B, H*W, C) -> (B, H, W, C).
    return y3.reshape(B, H, W, C)


if __name__ == "__main__":
    key = jax.random.PRNGKey(0)
    # Small NCHW input: batch=2, channels=4, spatial=16x16.
    x = jax.random.normal(key, (2, 4, 16, 16), dtype=jnp.float32)

    # Hot path: Pallas kernel (NCHW -> NHWC).
    y = permution(x, DIMS, contiguous=True)
    y = jax.block_until_ready(y)

    y_ref = jnp.transpose(x, DIMS)
    assert y.shape == y_ref.shape == (2, 16, 16, 4)
    assert y.dtype == x.dtype
    assert bool(jnp.array_equal(y, y_ref))

    # General-permutation fallback path of the same module API.
    y2 = jax.block_until_ready(permution(x, (1, 0, 2, 3)))
    assert bool(jnp.array_equal(y2, jnp.transpose(x, (1, 0, 2, 3))))

    print("KERNEL_OK")
</pallas_src>

<mosaic_0001>
module attributes {stable_mosaic.version = 11 : i64} {
  func.func @_transpose_minor_kernel(%arg0: i32, %arg1: i32, %arg2: memref<1x4x256xf32, #tpu.memory_space<vmem>>, %arg3: memref<1x256x4xf32, #tpu.memory_space<vmem>>) attributes {dimension_semantics = [#tpu.dimension_semantics<parallel>, #tpu.dimension_semantics<parallel>], iteration_bounds = array<i64: 2, 1>, scalar_prefetch = 0 : i64, scratch_operands = 0 : i64, tpu.core_type = #tpu.core_type<tc>, window_params = [{transform_indices = @transform_0, window_bounds = array<i64: 1, 4, 256>}, {transform_indices = @transform_1, window_bounds = array<i64: 1, 256, 4>}]} {
    %c0 = arith.constant 0 : index
    %c0_0 = arith.constant 0 : index
    %c0_1 = arith.constant 0 : index
    %0 = vector.load %arg2[%c0, %c0_0, %c0_1] : memref<1x4x256xf32, #tpu.memory_space<vmem>>, vector<1x4x256xf32>
    %1 = vector.shape_cast %0 : vector<1x4x256xf32> to vector<4x256xf32>
    %2 = tpu.transpose %1, [1, 0] : vector<4x256xf32> -> vector<256x4xf32>
    %c0_2 = arith.constant 0 : index
    %c0_3 = arith.constant 0 : index
    %c0_4 = arith.constant 0 : index
    %3 = vector.load %arg3[%c0_2, %c0_3, %c0_4] : memref<1x256x4xf32, #tpu.memory_space<vmem>>, vector<1x256x4xf32>
    %4 = vector.shape_cast %3 : vector<1x256x4xf32> to vector<256x4xf32>
    %5 = vector.shape_cast %2 : vector<256x4xf32> to vector<1x256x4xf32>
    tpu.vector_store %arg3[%c0_2, %c0_3, %c0_4], %5 {strides = array<i32>} : memref<1x256x4xf32, #tpu.memory_space<vmem>>, vector<1x256x4xf32>,
    return
  }
  func.func @transform_0(%arg0: i32, %arg1: i32) -> (i32, i32, i32) {
    %c0_i32 = arith.constant 0 : i32
    %c0_i32_0 = arith.constant 0 : i32
    return %arg0, %c0_i32, %arg1 : i32, i32, i32
  }
  func.func @transform_1(%arg0: i32, %arg1: i32) -> (i32, i32, i32) {
    %c0_i32 = arith.constant 0 : i32
    %c0_i32_0 = arith.constant 0 : i32
    return %arg0, %arg1, %c0_i32 : i32, i32, i32
  }
}

</mosaic_0001>

<llo_original>
// kernel: tpu_custom_call.1
$region0: #{tpu_custom_call.1}
  #allocation0 [shape = 'u32[]', space=smem, size = 0x4, offset = 0x4, fixed_abs, tag = 'smem constant byte address 0x4 - core index']
  #allocation1 [shape = 'u32[72,128]{1,0:T(1,128)}', space=vmem, size = 0x9000, scoped, tag = 'internal scratch']
  %s0 = inlined_call_operand.hbm [shape: f32[2,4,256], index: 0, kind: input, shape index: {}]
  %s1 = inlined_call_operand.vmem [shape: f32[2,256,4], index: 1, kind: output, shape index: {}]
  %s2 = sld [smem:[#allocation0]]
  $region41: #{tpu_custom_call.1} parent=0
    _
  %s4 = ssub.s32 1, %s2
  %s5 = scalar_select 0, %s4, %s2
  $region1: #{tpu_custom_call.1} parent=0
    #allocation2 [shape = 'u8[8192]{0}', space=vmem, size = 0x2000, scoped, tag = 'input window, operand 0']
    #allocation3 [shape = 's32[2]{0}', space=sflag, size = 0x8, scoped, tag = 'scoped memory for tpu_custom_call.1']
    %6 = vsyncpa [#allocation3], 0
    %s7 = scalar_lea.sflag [#allocation3], 1
    %8 = vsyncpa %s7, 0
    loop: start=0, step=1, limit=4
    $region2: #{tpu_custom_call.1} parent=1 // loop_pre_header
      _
    $region3: #{tpu_custom_call.1} parent=1 // loop_header
      %s10 = sphi 0, %s14
      %p11 = scmp.ge.s32.totalorder %s10, 4
      %s17 = sphi 0, %s29
      %s18 = sphi 0, %s25
      %s19 = sphi 0, %s17
      %s20 = sphi 0, %s18
      %s21 = sphi 0, %s19
      %s22 = sphi 0, %s20
      %s34 = sphi 0, %s36
      %s37 = sphi 0, %s34
      %s38 = sphi 0, %s37
      %s54 = sphi 0, %s38
      %s62 = sphi 0, %s64
      %s65 = sphi 0, %s62
      %s66 = sphi 0, %s65
      %s82 = sphi 0, %s66
    $region4: #{tpu_custom_call.1} parent=1 // loop_header_branch
      %13 = sbr.rel (%p11) target = $region8
    $region5: #{tpu_custom_call.1} parent=1 // loop_body
      %s15 = ssub.s32 %s10, 1
      %s16 = ssub.s32 %s10, 2
      %s23 = sadd.s32 1, %s18
      %p24 = scmp.ge.s32.totalorder %s23, 1
      %s25 = scalar_select %p24, 0, %s23
      %s26 = sadd.s32 1, %s17
      %s27 = scalar_select %p24, %s26, %s17
      %p28 = scmp.ge.s32.totalorder %s27, 2
      %s29 = scalar_select %p28, 0, %s27
      %s30 = ssub.s32 %s17, %s29
      %s31 = ssub.s32 %s18, %s25
      %s32 = sor.u32 %s30, %s31
      %p33 = scmp.eq.s32.totalorder %s32, 0
      %s35 = sadd.s32 %s34, 1
      %s36 = scalar_select %p33, %s34, %s35
      %p39 = pneg %p33
      %p40 = scmp.eq.s32.totalorder %s10, 1
      %p41 = por %p39, %p40
      %p42 = scmp.ne.s32.totalorder %s34, %s37
      %p43 = scmp.eq.s32.totalorder %s10, 0
      %p44 = por %p42, %p43
      %p45 = scmp.ne.s32.totalorder %s34, %s37
      %p46 = scmp.eq.s32.totalorder %s15, 1
      %p47 = por %p45, %p46
      %p48 = scmp.ne.s32.totalorder %s37, %s38
      %p49 = scmp.eq.s32.totalorder %s15, 0
      %p50 = por %p48, %p49
      %p51 = scmp.ne.s32.totalorder %s37, %s38
      %p52 = scmp.eq.s32.totalorder %s16, 1
      %p53 = por %p51, %p52
      %p55 = scmp.ne.s32.totalorder %s38, %s54
      %p56 = scmp.eq.s32.totalorder %s16, 0
      %p57 = por %p55, %p56
      %s58 = ssub.s32 %s17, %s29
      %s59 = ssub.s32 %s18, %s25
      %s60 = sor.u32 %s58, %s59
      %p61 = scmp.eq.s32.totalorder %s60, 0
      %s63 = sadd.s32 %s62, 1
      %s64 = scalar_select %p61, %s62, %s63
      %p67 = pneg %p61
      %p68 = scmp.eq.s32.totalorder %s10, 1
      %p69 = por %p67, %p68
      %p70 = scmp.ne.s32.totalorder %s62, %s65
      %p71 = scmp.eq.s32.totalorder %s10, 0
      %p72 = por %p70, %p71
      %p73 = scmp.ne.s32.totalorder %s62, %s65
      %p74 = scmp.eq.s32.totalorder %s15, 1
      %p75 = por %p73, %p74
      %p76 = scmp.ne.s32.totalorder %s65, %s66
      %p77 = scmp.eq.s32.totalorder %s15, 0
      %p78 = por %p76, %p77
      %p79 = scmp.ne.s32.totalorder %s65, %s66
      %p80 = scmp.eq.s32.totalorder %s16, 1
      %p81 = por %p79, %p80
      %p83 = scmp.ne.s32.totalorder %s66, %s82
      %p84 = scmp.eq.s32.totalorder %s16, 0
      %p85 = por %p83, %p84
      %p86 = scmp.le.s32.totalorder 1, %s10
      %p87 = scmp.lt.s32.totalorder %s10, 3
      %p88 = pnand %p86, %p87
      %p89 = pneg %p88
      // Predicated region
      $region9: #{tpu_custom_call.1} parent=5 // pred_check
        _
      $region10: #{tpu_custom_call.1} parent=5 // pred_check_branch
        %91 = sbr.rel (%p88) target = $region12
      $region11: #{tpu_custom_call.1} parent=5 // pred_region
        %s92 = ssub.s32 %s10, 1
      $region12: #{tpu_custom_call.1} parent=5 // pred_fallthru
        _
      %p93 = scmp.lt.s32.totalorder %s10, 2
      // Predicated region
      $region13: #{tpu_custom_call.1} parent=5 // pred_check
        %p94 = pneg %p93
      $region14: #{tpu_custom_call.1} parent=5 // pred_check_branch
        %96 = sbr.rel (%p94) target = $region16
      $region15: #{tpu_custom_call.1} parent=5 // pred_region
        // Predicated region
        $region17: #{tpu_custom_call.1} parent=15 // pred_check
          %p97 = pneg %p44
        $region18: #{tpu_custom_call.1} parent=15 // pred_check_branch
          %99 = sbr.rel (%p97) target = $region20
        $region19: #{tpu_custom_call.1} parent=15 // pred_region
          %s100 = sand.u32 %s34, 1
          %s101 = scalar_lea.sflag [#allocation3], %s100
          %s102 = sand.u32 %s34, 1
          %s103 = smul.addr %s102, 8
          %s104 = scalar_lea.vmem [#allocation2], %s103
          %s105 = smul.u32 2, %s18
          %107 = vsyncadd %s101, 0
          %s108 = smul.addr %s17, 2
          %s109 = sadd.s32 %s105, %s108
          %s110 = smul.addr %s109, 4
          %s111 = scalar_lea.hbm %s0, %s110
          %s113 = sshll.u32 %s111, 4
          %s114 = int_to_ptr.hbm [resolvable:$true] %s113
          %s115 = sshll.u32 %s104, 4
          %s116 = int_to_ptr.vmem [resolvable:$true] %s115
          %118 = dma.hbm_to_vmem [thread:$0]  %s114, 128, %s116, %s101
        $region20: #{tpu_custom_call.1} parent=15 // pred_fallthru
          _
      $region16: #{tpu_custom_call.1} parent=5 // pred_fallthru
        _
      %p119 = scmp.le.s32.totalorder 1, %s10
      %p120 = scmp.lt.s32.totalorder %s10, 3
      %p121 = pnand %p119, %p120
      %p122 = pneg %p121
      // Predicated region
      $region21: #{tpu_custom_call.1} parent=5 // pred_check
        _
      $region22: #{tpu_custom_call.1} parent=5 // pred_check_branch
        %124 = sbr.rel (%p121) target = $region24
      $region23: #{tpu_custom_call.1} parent=5 // pred_region
        %s125 = ssub.s32 %s10, 1
        %s126 = sand.u32 %s37, 1
        %s127 = scalar_lea.sflag [#allocation3], %s126
        %s128 = sand.u32 %s37, 1
        %s129 = smul.addr %s128, 8
        %s130 = scalar_lea.vmem [#allocation2], %s129
        // Predicated region
        $region25: #{tpu_custom_call.1} parent=23 // pred_check
          %p131 = pneg %p50
        $region26: #{tpu_custom_call.1} parent=23 // pred_check_branch
          %133 = sbr.rel (%p131) target = $region28
        $region27: #{tpu_custom_call.1} parent=23 // pred_region
          %135 = dma.done %s127, 128
        $region28: #{tpu_custom_call.1} parent=23 // pred_fallthru
          _
        %s136 = sand.u32 %s37, 1
        %s137 = scalar_lea.sflag [#allocation3], %s136
        %s138 = sand.u32 %s37, 1
        %s139 = smul.addr %s138, 8
        %s140 = scalar_lea.vmem [#allocation2], %s139
        %p141 = pneg %p50
        %p142 = pneg %p47
        %p143 = pneg %p78
        %p144 = pneg %p75
        %s145 = smul.u32 32, %s20
        %p146 = scmp.lt.s32.totalorder %s19, 1
        %s147 = scalar_select %p146, %s19, 1
        %p148 = scmp.lt.s32.totalorder %s145, 31
        %s149 = scalar_select %p148, %s145, 31
        %s150 = smul.addr %s147, 32
        %s151 = sadd.s32 %s149, %s150
        %s152 = smul.addr %s151, 8
        %s153 = scalar_lea.vmem %s1, %s152
        %s154 = smul.u32 2, %s20
        %s155 = smul.u32 32, %s20
        %p156 = scmp.lt.s32.totalorder %s19, 1
        %s157 = scalar_select %p156, %s19, 1
        %p158 = scmp.lt.s32.totalorder %s155, 31
        %s159 = scalar_select %p158, %s155, 31
        %s160 = smul.addr %s157, 32
        %s161 = sadd.s32 %s159, %s160
        %s162 = smul.addr %s161, 8
        %s163 = scalar_lea.vmem %s1, %s162
        %s164 = smul.u32 32, %s20
        %v165 = vld [vmem:[%s130] sm:$0xff]
        %167 = vst [vmem:[#allocation1] ss:$2 sm:$0xff] %v165
        %v168 = vld.sshfl [vmem:[#allocation1] sm:$0xff pattern:$0x75316420]
        %v169 = vld.sshfl [vmem:[#allocation1 + $0x8] sm:$0xff pattern:$0x75316420]
        %172 = vxpose.xlu0.b32.start [1/16] %v168, 128
        %173 = vxpose.xlu0.b32.cont [2/16] 0.0, 128
        %174 = vxpose.xlu0.b32.cont [3/16] 0.0, 128
        %175 = vxpose.xlu0.b32.cont [4/16] 0.0, 128
        %176 = vxpose.xlu0.b32.cont [5/16] 0.0, 128
        %177 = vxpose.xlu0.b32.cont [6/16] 0.0, 128
        %178 = vxpose.xlu0.b32.cont [7/16] 0.0, 128
        %179 = vxpose.xlu0.b32.cont [8/16] 0.0, 128
        %180 = vxpose.xlu0.b32.cont [9/16] 0.0, 128
        %181 = vxpose.xlu0.b32.cont [10/16] 0.0, 128
        %182 = vxpose.xlu0.b32.cont [11/16] 0.0, 128
        %183 = vxpose.xlu0.b32.cont [12/16] 0.0, 128
        %184 = vxpose.xlu0.b32.cont [13/16] 0.0, 128
        %185 = vxpose.xlu0.b32.cont [14/16] 0.0, 128
        %186 = vxpose.xlu0.b32.cont [15/16] 0.0, 128
        %187 = vxpose.xlu0.b32.end [16/16] 0.0, 128
        %v188 = vpop.trf.xlu0
        %v189 = vpop.trf.xlu0
        %v190 = vpop.trf.xlu0
        %v191 = vpop.trf.xlu0
        %v192 = vpop.trf.xlu0
        %v193 = vpop.trf.xlu0
        %v194 = vpop.trf.xlu0
        %v195 = vpop.trf.xlu0
        %v196 = vpop.trf.xlu0
        %v197 = vpop.trf.xlu0
        %v198 = vpop.trf.xlu0
        %v199 = vpop.trf.xlu0
        %v200 = vpop.trf.xlu0
        %v201 = vpop.trf.xlu0
        %v202 = vpop.trf.xlu0
        %v203 = vpop.trf.xlu0
        %204 = vxpose.xlu0.b32.start [1/16] %v169, 128
        %205 = vxpose.xlu0.b32.cont [2/16] 0.0, 128
        %206 = vxpose.xlu0.b32.cont [3/16] 0.0, 128
        %207 = vxpose.xlu0.b32.cont [4/16] 0.0, 128
        %208 = vxpose.xlu0.b32.cont [5/16] 0.0, 128
        %209 = vxpose.xlu0.b32.cont [6/16] 0.0, 128
        %210 = vxpose.xlu0.b32.cont [7/16] 0.0, 128
        %211 = vxpose.xlu0.b32.cont [8/16] 0.0, 128
        %212 = vxpose.xlu0.b32.cont [9/16] 0.0, 128
        %213 = vxpose.xlu0.b32.cont [10/16] 0.0, 128
        %214 = vxpose.xlu0.b32.cont [11/16] 0.0, 128
        %215 = vxpose.xlu0.b32.cont [12/16] 0.0, 128
        %216 = vxpose.xlu0.b32.cont [13/16] 0.0, 128
        %217 = vxpose.xlu0.b32.cont [14/16] 0.0, 128
        %218 = vxpose.xlu0.b32.cont [15/16] 0.0, 128
        %219 = vxpose.xlu0.b32.end [16/16] 0.0, 128
        %v220 = vpop.trf.xlu0
        %v221 = vpop.trf.xlu0
        %v222 = vpop.trf.xlu0
        %v223 = vpop.trf.xlu0
        %v224 = vpop.trf.xlu0
        %v225 = vpop.trf.xlu0
        %v226 = vpop.trf.xlu0
        %v227 = vpop.trf.xlu0
        %v228 = vpop.trf.xlu0
        %v229 = vpop.trf.xlu0
        %v230 = vpop.trf.xlu0
        %v231 = vpop.trf.xlu0
        %v232 = vpop.trf.xlu0
        %v233 = vpop.trf.xlu0
        %v234 = vpop.trf.xlu0
        %v235 = vpop.trf.xlu0
        %vm236 = vcmask 31744
        %237 = vst.msk [vmem:[%s163] sm:$0xff] %vm236, %v188
        %238 = vst.msk [vmem:[%s163 + $0x8] sm:$0xff] %vm236, %v189
        %239 = vst.msk [vmem:[%s163 + $0x10] sm:$0xff] %vm236, %v190
        %240 = vst.msk [vmem:[%s163 + $0x18] sm:$0xff] %vm236, %v191
        %241 = vst.msk [vmem:[%s163 + $0x20] sm:$0xff] %vm236, %v192
        %242 = vst.msk [vmem:[%s163 + $0x28] sm:$0xff] %vm236, %v193
        %243 = vst.msk [vmem:[%s163 + $0x30] sm:$0xff] %vm236, %v194
        %244 = vst.msk [vmem:[%s163 + $0x38] sm:$0xff] %vm236, %v195
        %245 = vst.msk [vmem:[%s163 + $0x40] sm:$0xff] %vm236, %v196
        %246 = vst.msk [vmem:[%s163 + $0x48] sm:$0xff] %vm236, %v197
        %247 = vst.msk [vmem:[%s163 + $0x50] sm:$0xff] %vm236, %v198
        %248 = vst.msk [vmem:[%s163 + $0x58] sm:$0xff] %vm236, %v199
        %249 = vst.msk [vmem:[%s163 + $0x60] sm:$0xff] %vm236, %v200
        %250 = vst.msk [vmem:[%s163 + $0x68] sm:$0xff] %vm236, %v201
        %251 = vst.msk [vmem:[%s163 + $0x70] sm:$0xff] %vm236, %v202
        %252 = vst.msk [vmem:[%s163 + $0x78] sm:$0xff] %vm236, %v203
        %253 = vst.msk [vmem:[%s163 + $0x80] sm:$0xff] %vm236, %v220
        %254 = vst.msk [vmem:[%s163 + $0x88] sm:$0xff] %vm236, %v221
        %255 = vst.msk [vmem:[%s163 + $0x90] sm:$0xff] %vm236, %v222
        %256 = vst.msk [vmem:[%s163 + $0x98] sm:$0xff] %vm236, %v223
        %257 = vst.msk [vmem:[%s163 + $0xa0] sm:$0xff] %vm236, %v224
        %258 = vst.msk [vmem:[%s163 + $0xa8] sm:$0xff] %vm236, %v225
        %259 = vst.msk [vmem:[%s163 + $0xb0] sm:$0xff] %vm236, %v226
        %260 = vst.msk [vmem:[%s163 + $0xb8] sm:$0xff] %vm236, %v227
        %261 = vst.msk [vmem:[%s163 + $0xc0] sm:$0xff] %vm236, %v228
        %262 = vst.msk [vmem:[%s163 + $0xc8] sm:$0xff] %vm236, %v229
        %263 = vst.msk [vmem:[%s163 + $0xd0] sm:$0xff] %vm236, %v230
        %264 = vst.msk [vmem:[%s163 + $0xd8] sm:$0xff] %vm236, %v231
        %265 = vst.msk [vmem:[%s163 + $0xe0] sm:$0xff] %vm236, %v232
        %266 = vst.msk [vmem:[%s163 + $0xe8] sm:$0xff] %vm236, %v233
        %267 = vst.msk [vmem:[%s163 + $0xf0] sm:$0xff] %vm236, %v234
        %268 = vst.msk [vmem:[%s163 + $0xf8] sm:$0xff] %vm236, %v235
        %s269 = smul.u32 32, %s20
        %p270 = scmp.lt.s32.totalorder %s19, 1
        %s271 = scalar_select %p270, %s19, 1
        %p272 = scmp.lt.s32.totalorder %s269, 31
        %s273 = scalar_select %p272, %s269, 31
        %s274 = smul.addr %s271, 32
        %s275 = sadd.s32 %s273, %s274
        %s276 = smul.addr %s275, 8
        %s277 = scalar_lea.vmem %s1, %s276
        // Predicated region
        $region29: #{tpu_custom_call.1} parent=23 // pred_check
          %p278 = pneg %p75
        $region30: #{tpu_custom_call.1} parent=23 // pred_check_branch
          %280 = sbr.rel (%p278) target = $region32
        $region31: #{tpu_custom_call.1} parent=23 // pred_region
          %s281 = smul.u32 32, %s20
        $region32: #{tpu_custom_call.1} parent=23 // pred_fallthru
          _
      $region24: #{tpu_custom_call.1} parent=5 // pred_fallthru
        _
      %p282 = scmp.le.s32.totalorder 2, %s10
      // Predicated region
      $region33: #{tpu_custom_call.1} parent=5 // pred_check
        %p283 = pneg %p282
      $region34: #{tpu_custom_call.1} parent=5 // pred_check_branch
        %285 = sbr.rel (%p283) target = $region36
      $region35: #{tpu_custom_call.1} parent=5 // pred_region
        %s286 = ssub.s32 %s10, 2
        // Predicated region
        $region37: #{tpu_custom_call.1} parent=35 // pred_check
          %p287 = pneg %p81
        $region38: #{tpu_custom_call.1} parent=35 // pred_check_branch
          %289 = sbr.rel (%p287) target = $region40
        $region39: #{tpu_custom_call.1} parent=35 // pred_region
          %s290 = smul.u32 32, %s22
          %p291 = scmp.lt.s32.totalorder %s21, 1
          %s292 = scalar_select %p291, %s21, 1
          %p293 = scmp.lt.s32.totalorder %s290, 31
          %s294 = scalar_select %p293, %s290, 31
          %s295 = smul.addr %s292, 32
          %s296 = sadd.s32 %s294, %s295
          %s297 = smul.addr %s296, 8
          %s298 = scalar_lea.vmem %s1, %s297
        $region40: #{tpu_custom_call.1} parent=35 // pred_fallthru
          _
      $region36: #{tpu_custom_call.1} parent=5 // pred_fallthru
        _
    $region6: #{tpu_custom_call.1} parent=1 // loop_footer
      %s14 = sadd.s32 1, %s10
    $region7: #{tpu_custom_call.1} parent=1 // loop_footer_branch
      %9 = sbr.rel target = $region3
    $region8: #{tpu_custom_call.1} parent=1 // loop_exit
      _
    %299 = vsyncpa [#allocation3], 1
    %s300 = scalar_lea.sflag [#allocation3], 1
    %301 = vsyncpa %s300, 1

</llo_original>
